<compile_context>
chip_gen: v5e
topology: v5e:2x2
jax: 0.10.0
libtpu: 0.0.40
codegen_flags: <defaults>
</compile_context>

<pallas_src>
import jax
import jax.numpy as jnp
from jax.experimental import pallas as pl
from jax.experimental.pallas import tpu as pltpu

_LANE = 128
_SUBLANE = 8
_SLOPE = 0.1
_OUT_TILE_BYTES = 4 << 20     # cap double-buffered output tile ~4 MiB (safe on v5e/v6e/v7x)
_MIN_SPLIT_ROWS = 2048        # force grid >= 2 once B >= this (v7x two-TC sharding)


def _round_up(x, m):
    return (x + m - 1) // m * m


def _cdiv(a, b):
    return (a + b - 1) // b


def _leaky_relu(x, slope=_SLOPE):
    # Identical to LeakyReLU(slope) for 0 < slope < 1; 2 VALU ops/elem, no select.
    return jnp.maximum(x, slope * x)


def d_encoder_kernel(x_ref, w0_ref, w_ref, b_ref, o_ref):
    """Fused 4-layer MLP on one (TB, ...) batch tile.

    x_ref  : (TB, 4)              raw input tile (unpadded feature dim)
    w0_ref : (4, D_PAD)           layer-1 weight, zero-padded along lanes
    w_ref  : (3, D_PAD, D_PAD)    stacked zero-padded weights for layers 2-4 (in, out)
    b_ref  : (4, D_PAD)           stacked zero-padded biases
    o_ref  : (TB, D_PAD)          output tile (first 2*z_dim lanes valid, rest zero)
    """
    x = x_ref[...]                               # (TB, 4)
    f_in = w0_ref.shape[0]

    # Layer 1: K=4 contraction as 4 broadcasted multiply-adds (cheap, robust lowering).
    acc = jnp.zeros((x.shape[0], w0_ref.shape[1]), jnp.float32)
    for k in range(f_in):                        # static unroll, f_in == 4
        acc = acc + x[:, k:k + 1] * w0_ref[k:k + 1, :]
    h = _leaky_relu(acc + b_ref[0:1, :])

    # Layers 2-4: full padded MXU matmuls; zero-padded lanes stay exactly zero.
    for layer in range(3):                       # static unroll
        z = jnp.dot(h, w_ref[layer],
                    preferred_element_type=jnp.float32) + b_ref[layer + 1:layer + 2, :]
        h = _leaky_relu(z)

    o_ref[...] = h.astype(o_ref.dtype)


def pack_params(params):
    """Pack the four (w, b) pairs into zero-padded slabs.

    Returns (w0, w_stack, b_stack, out_dim):
      w0      : (4, D_PAD)          layer-1 weight, lane-padded
      w_stack : (3, D_PAD, D_PAD)   layers 2-4, padded both ways
      b_stack : (4, D_PAD)          all biases, lane-padded
    Zero padding is inert: padded weight rows/cols and biases produce exact zeros,
    and leaky_relu(0) == 0, so downstream layers are unaffected.
    """
    out_dim = params[-1][0].shape[1]
    d_pad = max(_LANE, _round_up(out_dim, _LANE))

    w0_raw, b0_raw = params[0]
    f_in0, f_out0 = w0_raw.shape
    w0 = jnp.zeros((f_in0, d_pad), jnp.float32).at[:, :f_out0].set(w0_raw)

    w_stack = jnp.zeros((3, d_pad, d_pad), jnp.float32)
    b_stack = jnp.zeros((4, d_pad), jnp.float32)
    b_stack = b_stack.at[0, :f_out0].set(b0_raw.reshape(-1))
    for i, (w, b) in enumerate(params[1:]):
        fi, fo = w.shape
        w_stack = w_stack.at[i, :fi, :fo].set(w)
        b_stack = b_stack.at[i + 1, :fo].set(b.reshape(-1))
    return w0, w_stack, b_stack, out_dim


def d_encoder_forward(trans, w0, w_stack, b_stack, out_dim):
    """trans: (B, 4) float32 -> (B, 2*z_dim, 1) float32."""
    B, f_in = trans.shape
    d_pad = w_stack.shape[-1]

    # Batch tile: double-buffered output tile capped at ~_OUT_TILE_BYTES; grid >= 2
    # for large B so the batch axis shards across v7x's two TensorCores.
    max_tb = max(_SUBLANE, (_OUT_TILE_BYTES // (2 * d_pad * 4)) // _SUBLANE * _SUBLANE)
    n_tiles = _cdiv(B, max_tb)
    if B >= _MIN_SPLIT_ROWS:
        n_tiles = max(n_tiles, 2)
    tb = _round_up(_cdiv(B, n_tiles), _SUBLANE)
    grid = _cdiv(B, tb)

    y = pl.pallas_call(
        d_encoder_kernel,
        out_shape=jax.ShapeDtypeStruct((B, d_pad), jnp.float32),
        grid=(grid,),
        in_specs=[
            pl.BlockSpec((tb, f_in), lambda i: (i, 0)),            # unpadded input tile
            pl.BlockSpec((f_in, d_pad), lambda i: (0, 0)),         # VMEM-resident
            pl.BlockSpec((3, d_pad, d_pad), lambda i: (0, 0, 0)),  # VMEM-resident
            pl.BlockSpec((4, d_pad), lambda i: (0, 0)),            # VMEM-resident
        ],
        out_specs=pl.BlockSpec((tb, d_pad), lambda i: (i, 0)),
        compiler_params=pltpu.CompilerParams(
            dimension_semantics=("parallel",)),                    # v7x: shard batch on 2 TCs
    )(trans, w0, w_stack, b_stack)

    # Lane slice only if 2*z_dim isn't already a multiple of 128; rank-3 unsqueeze is free.
    if out_dim != d_pad:
        y = y[:, :out_dim]
    return y[:, :, None]


def init_params(key, z_dim):
    """Deterministic synthetic init (PyTorch Linear default-style: U(-1/sqrt(fan_in), +))."""
    dims = [4, 32, 64, 128, 2 * z_dim]
    params = []
    for i in range(4):
        key, kw, kb = jax.random.split(key, 3)
        fan_in, fan_out = dims[i], dims[i + 1]
        bound = 1.0 / jnp.sqrt(fan_in)
        w = jax.random.uniform(kw, (fan_in, fan_out), jnp.float32, -bound, bound)
        b = jax.random.uniform(kb, (1, fan_out), jnp.float32, -bound, bound)
        params.append((w, b))
    return params


def d_encoder_ref(trans, params):
    """Pure-JAX reference for verification."""
    h = trans
    for w, b in params:
        h = jnp.dot(h, w) + b
        h = jnp.where(h > 0, h, 0.1 * h)
    return h[:, :, None]


if __name__ == "__main__":
    key = jax.random.PRNGKey(0)
    z_dim = 64
    B = 8

    k_in, k_p = jax.random.split(key)
    trans = jax.random.normal(k_in, (B, 4), jnp.float32)
    params = init_params(k_p, z_dim)

    w0, w_stack, b_stack, out_dim = pack_params(params)
    out = d_encoder_forward(trans, w0, w_stack, b_stack, out_dim)
    out = jax.block_until_ready(out)

    ref = d_encoder_ref(trans, params)
    assert out.shape == (B, 2 * z_dim, 1), out.shape
    assert jnp.allclose(out, ref, atol=1e-5, rtol=1e-5), "mismatch vs reference"

    print("KERNEL_OK")
</pallas_src>

<mosaic_0001>
module attributes {stable_mosaic.version = 11 : i64} {
  func.func @d_encoder_kernel(%arg0: i32, %arg1: memref<8x4xf32, #tpu.memory_space<vmem>>, %arg2: memref<4x128xf32, #tpu.memory_space<vmem>>, %arg3: memref<3x128x128xf32, #tpu.memory_space<vmem>>, %arg4: memref<4x128xf32, #tpu.memory_space<vmem>>, %arg5: memref<8x128xf32, #tpu.memory_space<vmem>>) attributes {dimension_semantics = [#tpu.dimension_semantics<parallel>], iteration_bounds = array<i64: 1>, scalar_prefetch = 0 : i64, scratch_operands = 0 : i64, tpu.core_type = #tpu.core_type<tc>, window_params = [{transform_indices = @transform_0, window_bounds = array<i64: 8, 4>}, {pipeline_mode = #tpu.pipeline_mode<synchronous>, transform_indices = @transform_1, window_bounds = array<i64: 4, 128>}, {pipeline_mode = #tpu.pipeline_mode<synchronous>, transform_indices = @transform_2, window_bounds = array<i64: 3, 128, 128>}, {pipeline_mode = #tpu.pipeline_mode<synchronous>, transform_indices = @transform_3, window_bounds = array<i64: 4, 128>}, {transform_indices = @transform_4, window_bounds = array<i64: 8, 128>}]} {
    %c0 = arith.constant 0 : index
    %c0_0 = arith.constant 0 : index
    %0 = vector.load %arg1[%c0, %c0_0] : memref<8x4xf32, #tpu.memory_space<vmem>>, vector<8x4xf32>
    %cst = arith.constant 0.000000e+00 : f32
    %1 = vector.broadcast %cst : f32 to vector<8x128xf32>
    %2 = vector.extract_strided_slice %0 {offsets = [0, 0], sizes = [8, 1], strides = [1, 1]} : vector<8x4xf32> to vector<8x1xf32>
    %c0_1 = arith.constant 0 : index
    %c0_2 = arith.constant 0 : index
    %3 = vector.load %arg2[%c0_1, %c0_2] : memref<4x128xf32, #tpu.memory_space<vmem>>, vector<1x128xf32>
    %4 = vector.broadcast %2 : vector<8x1xf32> to vector<8x128xf32>
    %5 = vector.broadcast %3 : vector<1x128xf32> to vector<8x128xf32>
    %6 = arith.mulf %4, %5 : vector<8x128xf32>
    %7 = arith.addf %1, %6 : vector<8x128xf32>
    %8 = vector.extract_strided_slice %0 {offsets = [0, 1], sizes = [8, 1], strides = [1, 1]} : vector<8x4xf32> to vector<8x1xf32>
    %c1 = arith.constant 1 : index
    %c0_3 = arith.constant 0 : index
    %9 = vector.load %arg2[%c1, %c0_3] : memref<4x128xf32, #tpu.memory_space<vmem>>, vector<1x128xf32>
    %10 = vector.broadcast %8 : vector<8x1xf32> to vector<8x128xf32>
    %11 = vector.broadcast %9 : vector<1x128xf32> to vector<8x128xf32>
    %12 = arith.mulf %10, %11 : vector<8x128xf32>
    %13 = arith.addf %7, %12 : vector<8x128xf32>
    %14 = vector.extract_strided_slice %0 {offsets = [0, 2], sizes = [8, 1], strides = [1, 1]} : vector<8x4xf32> to vector<8x1xf32>
    %c2 = arith.constant 2 : index
    %c0_4 = arith.constant 0 : index
    %15 = vector.load %arg2[%c2, %c0_4] : memref<4x128xf32, #tpu.memory_space<vmem>>, vector<1x128xf32>
    %16 = vector.broadcast %14 : vector<8x1xf32> to vector<8x128xf32>
    %17 = vector.broadcast %15 : vector<1x128xf32> to vector<8x128xf32>
    %18 = arith.mulf %16, %17 : vector<8x128xf32>
    %19 = arith.addf %13, %18 : vector<8x128xf32>
    %20 = vector.extract_strided_slice %0 {offsets = [0, 3], sizes = [8, 1], strides = [1, 1]} : vector<8x4xf32> to vector<8x1xf32>
    %c3 = arith.constant 3 : index
    %c0_5 = arith.constant 0 : index
    %21 = vector.load %arg2[%c3, %c0_5] : memref<4x128xf32, #tpu.memory_space<vmem>>, vector<1x128xf32>
    %22 = vector.broadcast %20 : vector<8x1xf32> to vector<8x128xf32>
    %23 = vector.broadcast %21 : vector<1x128xf32> to vector<8x128xf32>
    %24 = arith.mulf %22, %23 : vector<8x128xf32>
    %25 = arith.addf %19, %24 : vector<8x128xf32>
    %c0_6 = arith.constant 0 : index
    %c0_7 = arith.constant 0 : index
    %26 = vector.load %arg4[%c0_6, %c0_7] : memref<4x128xf32, #tpu.memory_space<vmem>>, vector<1x128xf32>
    %27 = vector.broadcast %26 : vector<1x128xf32> to vector<8x128xf32>
    %28 = arith.addf %25, %27 : vector<8x128xf32>
    %cst_8 = arith.constant 1.000000e-01 : f32
    %29 = vector.broadcast %cst_8 : f32 to vector<8x128xf32>
    %30 = arith.mulf %29, %28 : vector<8x128xf32>
    %31 = arith.maximumf %28, %30 : vector<8x128xf32>
    %c0_9 = arith.constant 0 : index
    %c0_10 = arith.constant 0 : index
    %c0_11 = arith.constant 0 : index
    %32 = vector.load %arg3[%c0_9, %c0_10, %c0_11] : memref<3x128x128xf32, #tpu.memory_space<vmem>>, vector<1x128x128xf32>
    %33 = vector.shape_cast %32 : vector<1x128x128xf32> to vector<128x128xf32>
    %cst_12 = arith.constant dense<0.000000e+00> : vector<8x128xf32>
    %34 = tpu.matmul %31, %33, %cst_12 {dimension_numbers = #tpu.dot_dimension_numbers<[1], [0], [0], [1], [0, 0, 1, 1], [], []>} : vector<8x128xf32>, vector<128x128xf32>, vector<8x128xf32> -> vector<8x128xf32>
    %c1_13 = arith.constant 1 : index
    %c0_14 = arith.constant 0 : index
    %35 = vector.load %arg4[%c1_13, %c0_14] : memref<4x128xf32, #tpu.memory_space<vmem>>, vector<1x128xf32>
    %36 = vector.broadcast %35 : vector<1x128xf32> to vector<8x128xf32>
    %37 = arith.addf %34, %36 : vector<8x128xf32>
    %cst_15 = arith.constant 1.000000e-01 : f32
    %38 = vector.broadcast %cst_15 : f32 to vector<8x128xf32>
    %39 = arith.mulf %38, %37 : vector<8x128xf32>
    %40 = arith.maximumf %37, %39 : vector<8x128xf32>
    %c1_16 = arith.constant 1 : index
    %c0_17 = arith.constant 0 : index
    %c0_18 = arith.constant 0 : index
    %41 = vector.load %arg3[%c1_16, %c0_17, %c0_18] : memref<3x128x128xf32, #tpu.memory_space<vmem>>, vector<1x128x128xf32>
    %42 = vector.shape_cast %41 : vector<1x128x128xf32> to vector<128x128xf32>
    %cst_19 = arith.constant dense<0.000000e+00> : vector<8x128xf32>
    %43 = tpu.matmul %40, %42, %cst_19 {dimension_numbers = #tpu.dot_dimension_numbers<[1], [0], [0], [1], [0, 0, 1, 1], [], []>} : vector<8x128xf32>, vector<128x128xf32>, vector<8x128xf32> -> vector<8x128xf32>
    %c2_20 = arith.constant 2 : index
    %c0_21 = arith.constant 0 : index
    %44 = vector.load %arg4[%c2_20, %c0_21] : memref<4x128xf32, #tpu.memory_space<vmem>>, vector<1x128xf32>
    %45 = vector.broadcast %44 : vector<1x128xf32> to vector<8x128xf32>
    %46 = arith.addf %43, %45 : vector<8x128xf32>
    %cst_22 = arith.constant 1.000000e-01 : f32
    %47 = vector.broadcast %cst_22 : f32 to vector<8x128xf32>
    %48 = arith.mulf %47, %46 : vector<8x128xf32>
    %49 = arith.maximumf %46, %48 : vector<8x128xf32>
    %c2_23 = arith.constant 2 : index
    %c0_24 = arith.constant 0 : index
    %c0_25 = arith.constant 0 : index
    %50 = vector.load %arg3[%c2_23, %c0_24, %c0_25] : memref<3x128x128xf32, #tpu.memory_space<vmem>>, vector<1x128x128xf32>
    %51 = vector.shape_cast %50 : vector<1x128x128xf32> to vector<128x128xf32>
    %cst_26 = arith.constant dense<0.000000e+00> : vector<8x128xf32>
    %52 = tpu.matmul %49, %51, %cst_26 {dimension_numbers = #tpu.dot_dimension_numbers<[1], [0], [0], [1], [0, 0, 1, 1], [], []>} : vector<8x128xf32>, vector<128x128xf32>, vector<8x128xf32> -> vector<8x128xf32>
    %c3_27 = arith.constant 3 : index
    %c0_28 = arith.constant 0 : index
    %53 = vector.load %arg4[%c3_27, %c0_28] : memref<4x128xf32, #tpu.memory_space<vmem>>, vector<1x128xf32>
    %54 = vector.broadcast %53 : vector<1x128xf32> to vector<8x128xf32>
    %55 = arith.addf %52, %54 : vector<8x128xf32>
    %cst_29 = arith.constant 1.000000e-01 : f32
    %56 = vector.broadcast %cst_29 : f32 to vector<8x128xf32>
    %57 = arith.mulf %56, %55 : vector<8x128xf32>
    %58 = arith.maximumf %55, %57 : vector<8x128xf32>
    %c0_30 = arith.constant 0 : index
    %c0_31 = arith.constant 0 : index
    %59 = vector.load %arg5[%c0_30, %c0_31] : memref<8x128xf32, #tpu.memory_space<vmem>>, vector<8x128xf32>
    tpu.vector_store %arg5[%c0_30, %c0_31], %58 {strides = array<i32>} : memref<8x128xf32, #tpu.memory_space<vmem>>, vector<8x128xf32>,
    return
  }
  func.func @transform_0(%arg0: i32) -> (i32, i32) {
    %c0_i32 = arith.constant 0 : i32
    %c0_i32_0 = arith.constant 0 : i32
    return %arg0, %c0_i32 : i32, i32
  }
  func.func @transform_1(%arg0: i32) -> (i32, i32) {
    %c0_i32 = arith.constant 0 : i32
    %c0_i32_0 = arith.constant 0 : i32
    %c0_i32_1 = arith.constant 0 : i32
    return %c0_i32, %c0_i32_0 : i32, i32
  }
  func.func @transform_2(%arg0: i32) -> (i32, i32, i32) {
    %c0_i32 = arith.constant 0 : i32
    %c0_i32_0 = arith.constant 0 : i32
    %c0_i32_1 = arith.constant 0 : i32
    %c0_i32_2 = arith.constant 0 : i32
    return %c0_i32, %c0_i32_0, %c0_i32_1 : i32, i32, i32
  }
  func.func @transform_3(%arg0: i32) -> (i32, i32) {
    %c0_i32 = arith.constant 0 : i32
    %c0_i32_0 = arith.constant 0 : i32
    %c0_i32_1 = arith.constant 0 : i32
    return %c0_i32, %c0_i32_0 : i32, i32
  }
  func.func @transform_4(%arg0: i32) -> (i32, i32) {
    %c0_i32 = arith.constant 0 : i32
    %c0_i32_0 = arith.constant 0 : i32
    return %arg0, %c0_i32 : i32, i32
  }
}

</mosaic_0001>

<llo_original>
// kernel: tpu_custom_call.1
$region0: #{tpu_custom_call.1}
  #allocation0 [shape = 'u32[]', space=smem, size = 0x4, offset = 0x4, fixed_abs, tag = 'smem constant byte address 0x4 - core index']
  #allocation1 [shape = 'u32[72,128]{1,0:T(1,128)}', space=vmem, size = 0x9000, scoped, tag = 'internal scratch']
  %s0 = inlined_call_operand.vmem [shape: f32[8,4], index: 0, kind: input, shape index: {}]
  %s1 = inlined_call_operand.vmem [shape: f32[4,128], index: 1, kind: input, shape index: {}]
  %s2 = inlined_call_operand.hbm [shape: f32[3,128,128], index: 2, kind: input, shape index: {}]
  %s3 = inlined_call_operand.vmem [shape: f32[4,128], index: 3, kind: input, shape index: {}]
  %s4 = inlined_call_operand.hbm [shape: f32[8,128], index: 4, kind: output, shape index: {}]
  %s5 = sld [smem:[#allocation0]]
  $region30: #{tpu_custom_call.1} parent=0
    _
  %s7 = ssub.s32 1, %s5
  %s8 = scalar_select 0, %s7, %s5
  $region1: #{tpu_custom_call.1} parent=0
    #allocation2 [shape = 'u8[196608]{0}', space=vmem, size = 0x30000, scoped, tag = 'input window, operand 2, single buffered']
    #allocation3 [shape = 's32[1]{0}', space=sflag, size = 0x4, scoped, tag = 'scoped memory for tpu_custom_call.1']
    #allocation4 [shape = 's32[1]{0}', space=sflag, size = 0x4, scoped, tag = 'scoped memory for tpu_custom_call.1']
    #allocation5 [shape = 'u8[4096]{0}', space=vmem, size = 0x1000, scoped, tag = 'output window, operand 0, single buffered']
    %9 = vsyncpa [#allocation3], 0
    %10 = vsyncpa [#allocation4], 0
    // Predicated region
    $region2: #{tpu_custom_call.1} parent=1 // pred_check
      _
    $region3: #{tpu_custom_call.1} parent=1 // pred_check_branch
      %12 = sbr.rel (0) target = $region5
    $region4: #{tpu_custom_call.1} parent=1 // pred_region
      _
    $region5: #{tpu_custom_call.1} parent=1 // pred_fallthru
      _
    // Predicated region
    $region6: #{tpu_custom_call.1} parent=1 // pred_check
      _
    $region7: #{tpu_custom_call.1} parent=1 // pred_check_branch
      %14 = sbr.rel (0) target = $region9
    $region8: #{tpu_custom_call.1} parent=1 // pred_region
      _
    $region9: #{tpu_custom_call.1} parent=1 // pred_fallthru
      _
    // Predicated region
    $region10: #{tpu_custom_call.1} parent=1 // pred_check
      _
    $region11: #{tpu_custom_call.1} parent=1 // pred_check_branch
      %16 = sbr.rel (0) target = $region13
    $region12: #{tpu_custom_call.1} parent=1 // pred_region
      %18 = vsyncadd [#allocation3], 0
      %s19 = sshll.u32 %s2, 4
      %s20 = int_to_ptr.hbm [resolvable:$true] %s19
      %s21 = sshll.u32 [#allocation2], 4
      %s22 = int_to_ptr.vmem [resolvable:$true] %s21
      %27 = dma.hbm_to_vmem [thread:$0]  %s20, 6144, %s22, [#allocation3], 128, 128, 8
    $region13: #{tpu_custom_call.1} parent=1 // pred_fallthru
      _
    // Predicated region
    $region14: #{tpu_custom_call.1} parent=1 // pred_check
      _
    $region15: #{tpu_custom_call.1} parent=1 // pred_check_branch
      %29 = sbr.rel (0) target = $region17
    $region16: #{tpu_custom_call.1} parent=1 // pred_region
      _
    $region17: #{tpu_custom_call.1} parent=1 // pred_fallthru
      _
    // Predicated region
    $region18: #{tpu_custom_call.1} parent=1 // pred_check
      _
    $region19: #{tpu_custom_call.1} parent=1 // pred_check_branch
      %31 = sbr.rel (0) target = $region21
    $region20: #{tpu_custom_call.1} parent=1 // pred_region
      %33 = dma.done [#allocation3], 6144
    $region21: #{tpu_custom_call.1} parent=1 // pred_fallthru
      _
    %v34 = vld [vmem:[%s0] sm:$0xff]
    %v35 = vld [vmem:[%s1] sm:$0x1]
    %37 = vset.pattern.permute.xlu0 0
    %38 = vperm.xlu0 %37, %v34
    %v39 = vpop.permute.xlu0 %38
    %v41 = vperm.slane %v35, 0
    %v42 = vmul.f32 %v39, %v41
    %v43 = vadd.f32 %v42, 0.0
    %v44 = vld [vmem:[%s1 + $0x1] sm:$0x1]
    %45 = vset.pattern.permute.xlu0 1
    %46 = vperm.xlu0 %45, %v34
    %v47 = vpop.permute.xlu0 %46
    %v49 = vperm.slane %v44, 0
    %v50 = vmul.f32 %v47, %v49
    %v51 = vadd.f32 %v43, %v50
    %v52 = vld [vmem:[%s1 + $0x2] sm:$0x1]
    %53 = vset.pattern.permute.xlu0 2
    %54 = vperm.xlu0 %53, %v34
    %v55 = vpop.permute.xlu0 %54
    %v57 = vperm.slane %v52, 0
    %v58 = vmul.f32 %v55, %v57
    %v59 = vadd.f32 %v51, %v58
    %v60 = vld [vmem:[%s1 + $0x3] sm:$0x1]
    %61 = vset.pattern.permute.xlu0 3
    %62 = vperm.xlu0 %61, %v34
    %v63 = vpop.permute.xlu0 %62
    %v65 = vperm.slane %v60, 0
    %v66 = vmul.f32 %v63, %v65
    %v67 = vadd.f32 %v59, %v66
    %v68 = vld [vmem:[%s3] sm:$0x1]
    %v69 = vperm.slane %v68, 0
    %v70 = vadd.f32 %v67, %v69
    %v71 = vmul.f32 %v70, 0.1
    %v72 = vmax.f32 %v70, %v71
    %v73 = vld [vmem:[#allocation2] sm:$0xff]
    %v74 = vld [vmem:[#allocation2 + $0x8] sm:$0xff]
    %v75 = vld [vmem:[#allocation2 + $0x10] sm:$0xff]
    %v76 = vld [vmem:[#allocation2 + $0x18] sm:$0xff]
    %v77 = vld [vmem:[#allocation2 + $0x20] sm:$0xff]
    %v78 = vld [vmem:[#allocation2 + $0x28] sm:$0xff]
    %v79 = vld [vmem:[#allocation2 + $0x30] sm:$0xff]
    %v80 = vld [vmem:[#allocation2 + $0x38] sm:$0xff]
    %v81 = vld [vmem:[#allocation2 + $0x40] sm:$0xff]
    %v82 = vld [vmem:[#allocation2 + $0x48] sm:$0xff]
    %v83 = vld [vmem:[#allocation2 + $0x50] sm:$0xff]
    %v84 = vld [vmem:[#allocation2 + $0x58] sm:$0xff]
    %v85 = vld [vmem:[#allocation2 + $0x60] sm:$0xff]
    %v86 = vld [vmem:[#allocation2 + $0x68] sm:$0xff]
    %v87 = vld [vmem:[#allocation2 + $0x70] sm:$0xff]
    %v88 = vld [vmem:[#allocation2 + $0x78] sm:$0xff]
    %v89 = vld [vmem:[%s3 + $0x1] sm:$0x1]
    %v90 = vperm.slane %v89, 0
    %91 = vmatpush.msra.mxu0 %v88
    %92 = vmatpush.msra.mxu0 %v87
    %93 = vmatpush.msra.mxu0 %v86
    %94 = vmatpush.msra.mxu0 %v85
    %95 = vmatpush.msra.mxu0 %v84
    %96 = vmatpush.msra.mxu0 %v83
    %97 = vmatpush.msra.mxu0 %v82
    %98 = vmatpush.msra.mxu0 %v81
    %99 = vmatpush.msra.mxu0 %v80
    %100 = vmatpush.msra.mxu0 %v79
    %101 = vmatpush.msra.mxu0 %v78
    %102 = vmatpush.msra.mxu0 %v77
    %103 = vmatpush.msra.mxu0 %v76
    %104 = vmatpush.msra.mxu0 %v75
    %105 = vmatpush.msra.mxu0 %v74
    %106 = vmatpush.msra.mxu0 %v73
    %107 = vmatmul.f32.gmra.mxu0 %v72
    %v108 = vpop.f32.mrf.mxu0
    %v109 = vadd.f32 %v90, %v108
    %110 = vdwg.mxu0
    %v111 = vmul.f32 %v109, 0.1
    %v112 = vmax.f32 %v109, %v111
    %s113 = scalar_lea.vmem [#allocation2], 128
    %v114 = vld [vmem:[%s113] sm:$0xff]
    %v115 = vld [vmem:[%s113 + $0x8] sm:$0xff]
    %v116 = vld [vmem:[%s113 + $0x10] sm:$0xff]
    %v117 = vld [vmem:[%s113 + $0x18] sm:$0xff]
    %v118 = vld [vmem:[%s113 + $0x20] sm:$0xff]
    %v119 = vld [vmem:[%s113 + $0x28] sm:$0xff]
    %v120 = vld [vmem:[%s113 + $0x30] sm:$0xff]
    %v121 = vld [vmem:[%s113 + $0x38] sm:$0xff]
    %v122 = vld [vmem:[%s113 + $0x40] sm:$0xff]
    %v123 = vld [vmem:[%s113 + $0x48] sm:$0xff]
    %v124 = vld [vmem:[%s113 + $0x50] sm:$0xff]
    %v125 = vld [vmem:[%s113 + $0x58] sm:$0xff]
    %v126 = vld [vmem:[%s113 + $0x60] sm:$0xff]
    %v127 = vld [vmem:[%s113 + $0x68] sm:$0xff]
    %v128 = vld [vmem:[%s113 + $0x70] sm:$0xff]
    %v129 = vld [vmem:[%s113 + $0x78] sm:$0xff]
    %v130 = vld [vmem:[%s3 + $0x2] sm:$0x1]
    %v131 = vperm.slane %v130, 0
    %132 = vmatpush.msra.mxu0 %v129
    %133 = vmatpush.msra.mxu0 %v128
    %134 = vmatpush.msra.mxu0 %v127
    %135 = vmatpush.msra.mxu0 %v126
    %136 = vmatpush.msra.mxu0 %v125
    %137 = vmatpush.msra.mxu0 %v124
    %138 = vmatpush.msra.mxu0 %v123
    %139 = vmatpush.msra.mxu0 %v122
    %140 = vmatpush.msra.mxu0 %v121
    %141 = vmatpush.msra.mxu0 %v120
    %142 = vmatpush.msra.mxu0 %v119
    %143 = vmatpush.msra.mxu0 %v118
    %144 = vmatpush.msra.mxu0 %v117
    %145 = vmatpush.msra.mxu0 %v116
    %146 = vmatpush.msra.mxu0 %v115
    %147 = vmatpush.msra.mxu0 %v114
    %148 = vmatmul.f32.gmra.mxu0 %v112
    %v149 = vpop.f32.mrf.mxu0
    %v150 = vadd.f32 %v131, %v149
    %151 = vdwg.mxu0
    %v152 = vmul.f32 %v150, 0.1
    %v153 = vmax.f32 %v150, %v152
    %s154 = scalar_lea.vmem [#allocation2], 256
    %v155 = vld [vmem:[%s154] sm:$0xff]
    %v156 = vld [vmem:[%s154 + $0x8] sm:$0xff]
    %v157 = vld [vmem:[%s154 + $0x10] sm:$0xff]
    %v158 = vld [vmem:[%s154 + $0x18] sm:$0xff]
    %v159 = vld [vmem:[%s154 + $0x20] sm:$0xff]
    %v160 = vld [vmem:[%s154 + $0x28] sm:$0xff]
    %v161 = vld [vmem:[%s154 + $0x30] sm:$0xff]
    %v162 = vld [vmem:[%s154 + $0x38] sm:$0xff]
    %v163 = vld [vmem:[%s154 + $0x40] sm:$0xff]
    %v164 = vld [vmem:[%s154 + $0x48] sm:$0xff]
    %v165 = vld [vmem:[%s154 + $0x50] sm:$0xff]
    %v166 = vld [vmem:[%s154 + $0x58] sm:$0xff]
    %v167 = vld [vmem:[%s154 + $0x60] sm:$0xff]
    %v168 = vld [vmem:[%s154 + $0x68] sm:$0xff]
    %v169 = vld [vmem:[%s154 + $0x70] sm:$0xff]
    %v170 = vld [vmem:[%s154 + $0x78] sm:$0xff]
    %v171 = vld [vmem:[%s3 + $0x3] sm:$0x1]
    %v172 = vperm.slane %v171, 0
    %173 = vmatpush.msra.mxu0 %v170
    %174 = vmatpush.msra.mxu0 %v169
    %175 = vmatpush.msra.mxu0 %v168
    %176 = vmatpush.msra.mxu0 %v167
    %177 = vmatpush.msra.mxu0 %v166
    %178 = vmatpush.msra.mxu0 %v165
    %179 = vmatpush.msra.mxu0 %v164
    %180 = vmatpush.msra.mxu0 %v163
    %181 = vmatpush.msra.mxu0 %v162
    %182 = vmatpush.msra.mxu0 %v161
    %183 = vmatpush.msra.mxu0 %v160
    %184 = vmatpush.msra.mxu0 %v159
    %185 = vmatpush.msra.mxu0 %v158
    %186 = vmatpush.msra.mxu0 %v157
    %187 = vmatpush.msra.mxu0 %v156
    %188 = vmatpush.msra.mxu0 %v155
    %189 = vmatmul.f32.gmra.mxu0 %v153
    %v190 = vpop.f32.mrf.mxu0
    %v191 = vadd.f32 %v172, %v190
    %192 = vdwg.mxu0
    %v193 = vmul.f32 %v191, 0.1
    %v194 = vmax.f32 %v191, %v193
    %195 = vst [vmem:[#allocation5] sm:$0xff] %v194
    // Predicated region
    $region22: #{tpu_custom_call.1} parent=1 // pred_check
      _
    $region23: #{tpu_custom_call.1} parent=1 // pred_check_branch
      %197 = sbr.rel (0) target = $region25
    $region24: #{tpu_custom_call.1} parent=1 // pred_region
      %199 = vsyncadd [#allocation4], 0
      %s201 = sshll.u32 [#allocation5], 4
      %s202 = int_to_ptr.vmem [resolvable:$true] %s201
      %s203 = sshll.u32 %s4, 4
      %s204 = int_to_ptr.hbm [resolvable:$true] %s203
      %206 = dma.vmem_to_hbm [thread:$0]  %s202, 128, %s204, [#allocation4]
    $region25: #{tpu_custom_call.1} parent=1 // pred_fallthru
      _
    // Predicated region
    $region26: #{tpu_custom_call.1} parent=1 // pred_check
      _
    $region27: #{tpu_custom_call.1} parent=1 // pred_check_branch
      %208 = sbr.rel (0) target = $region29
    $region28: #{tpu_custom_call.1} parent=1 // pred_region
      %210 = dma.done [#allocation4], 128
    $region29: #{tpu_custom_call.1} parent=1 // pred_fallthru
      _
    %211 = vsyncpa [#allocation3], 1
    %212 = vsyncpa [#allocation4], 1

</llo_original>
